<compile_context>
chip_gen: v5e
topology: v5e:2x2
jax: 0.10.0
libtpu: 0.0.40
codegen_flags: <defaults>
</compile_context>

<pallas_src>
import jax
import jax.numpy as jnp
from jax import lax
from jax.experimental import pallas as pl
from jax.experimental.pallas import tpu as pltpu


COUT = 3        # Output_conv always emits 3 channels
COUT_PAD = 8    # pad to a full sublane count for the MXU lhs / accumulator


# ---------------------------------------------------------------------------
# Pallas kernel (one grid step = one batch element, full spatial plane)
#   a   = relu(x * scale + shift)                      (BN eval + ReLU)
#   acc = sum_k  W_k (8, C) @ tap_k (C, HW)            (9 conv taps via roll)
#   out = tanh(acc[:3] + b) * 0.5 + 0.5                (fused epilogue)
# ---------------------------------------------------------------------------
def _make_kernel(C, H, W):
    HW = H * W
    offsets = [(kh - 1, kw - 1) for kh in range(3) for kw in range(3)]

    def kernel(x_ref, scale_ref, shift_ref, w_ref, b_ref, o_ref):
        # BN (eval mode) + ReLU, fused: the only HBM read of the activation.
        x = x_ref[...]                                         # (C, HW) f32
        a = jnp.maximum(x * scale_ref[...] + shift_ref[...], 0.0)

        # Boundary masks for the implicit 1-pixel zero padding (post BN+ReLU).
        idx = lax.broadcasted_iota(jnp.int32, (1, HW), 1)      # flat h*W + w
        wcol = lax.rem(idx, jnp.int32(W))                      # column index

        acc = jnp.zeros((COUT_PAD, HW), jnp.float32)
        for k, (dh, dw) in enumerate(offsets):
            if dh == 0 and dw == 0:
                tap = a
            else:
                shift = (-(dh * W + dw)) % HW
                tap = pltpu.roll(a, shift=shift, axis=1)       # XLU lane roll
                valid = None
                if dh == -1:                                   # source row h-1
                    valid = idx >= W
                elif dh == 1:                                  # source row h+1
                    valid = idx < (H - 1) * W
                if dw == -1:                                   # source col w-1
                    vw = wcol >= 1
                    valid = vw if valid is None else (valid & vw)
                elif dw == 1:                                   # source col w+1
                    vw = wcol <= W - 2
                    valid = vw if valid is None else (valid & vw)
                tap = jnp.where(valid, tap, 0.0)
            acc = acc + jnp.dot(w_ref[k], tap,
                                preferred_element_type=jnp.float32)

        # Bias + tanh + (x+1)/2 epilogue, lane-dense (3, HW) store.
        y = acc[:COUT] + b_ref[...]
        o_ref[...] = jnp.tanh(y) * 0.5 + 0.5

    return kernel


# ---------------------------------------------------------------------------
# Forward pass (jitted as a whole; all pre/post ops are free metadata / tiny)
# ---------------------------------------------------------------------------
def output_conv_forward(params, x):
    """x: (B, C, H, W) float32 NCHW  ->  (B, 3, H, W) float32."""
    B, C, H, W = x.shape
    HW = H * W
    bn = params["bn"]
    w, b = params["w_conv"], params["b_conv"]

    # eval-mode BN folded to per-channel scale/shift (tiny, computed once)
    scale = (bn["gamma"] * lax.rsqrt(bn["var"] + bn["eps"])).reshape(C, 1)
    shift = bn["beta"].reshape(C, 1) - bn["mean"].reshape(C, 1) * scale

    # per-tap weight matrices, Cout padded 3 -> 8 (zero rows) for full sublanes
    w_taps = jnp.transpose(w, (2, 3, 0, 1)).reshape(9, COUT, C)
    w_taps = jnp.pad(w_taps, ((0, 0), (0, COUT_PAD - COUT), (0, 0)))
    b2 = b.reshape(COUT, 1)

    x_flat = x.reshape(B, C, HW)        # free row-major metadata reshape

    flops = 2 * B * COUT * (9 * C) * HW
    transcendentals = B * COUT * HW
    bytes_accessed = 4 * (B * C * HW + B * COUT * HW
                          + 9 * COUT_PAD * C + 2 * C + COUT)

    out = pl.pallas_call(
        _make_kernel(C, H, W),
        out_shape=jax.ShapeDtypeStruct((B, COUT, HW), jnp.float32),
        grid=(B,),
        in_specs=[
            pl.BlockSpec((None, C, HW), lambda bi: (bi, 0, 0)),      # activation
            pl.BlockSpec((C, 1), lambda bi: (0, 0)),                 # BN scale
            pl.BlockSpec((C, 1), lambda bi: (0, 0)),                 # BN shift
            pl.BlockSpec((9, COUT_PAD, C), lambda bi: (0, 0, 0)),    # conv taps
            pl.BlockSpec((COUT, 1), lambda bi: (0, 0)),              # conv bias
        ],
        out_specs=pl.BlockSpec((None, COUT, HW), lambda bi: (bi, 0, 0)),
        compiler_params=pltpu.CompilerParams(
            dimension_semantics=("parallel",)),
        cost_estimate=pl.CostEstimate(flops=flops,
                                      transcendentals=transcendentals,
                                      bytes_accessed=bytes_accessed),
    )(x_flat, scale, shift, w_taps, b2)

    return out.reshape(B, COUT, H, W)   # free reshape, no transpose


# ---------------------------------------------------------------------------
# Parameter setup (deterministic, in-script; shapes from __init__)
# ---------------------------------------------------------------------------
def _spectral_normalize(w, n_iter=30):
    # TODO(synk): spectral_norm's per-step u/v buffer updates are a training-time
    # side effect; here the converged singular value is folded into the weight once.
    wm = w.reshape(w.shape[0], -1)
    v = jnp.ones((wm.shape[1],), jnp.float32) / jnp.sqrt(float(wm.shape[1]))
    for _ in range(n_iter):
        u = wm @ v
        u = u / (jnp.linalg.norm(u) + 1e-12)
        v = wm.T @ u
        v = v / (jnp.linalg.norm(v) + 1e-12)
    sigma = u @ (wm @ v)
    return w / sigma


def init_params(key, channels):
    ks = jax.random.split(key, 6)
    fan_in = channels * 9

    def uni(k, shape):
        bnd = 1.0 / jnp.sqrt(float(fan_in))
        return jax.random.uniform(k, shape, jnp.float32, -bnd, bnd)

    w_conv = _spectral_normalize(uni(ks[0], (3, channels, 3, 3)))
    b_conv = uni(ks[1], (3,))
    bn = dict(
        gamma=jax.random.uniform(ks[2], (channels,), jnp.float32, 0.5, 1.5),
        beta=jax.random.uniform(ks[3], (channels,), jnp.float32, -0.5, 0.5),
        mean=jax.random.normal(ks[4], (channels,), jnp.float32) * 0.1,
        var=jax.random.uniform(ks[5], (channels,), jnp.float32, 0.5, 1.5),
        eps=1e-3,
    )
    return dict(w_conv=w_conv, b_conv=b_conv, bn=bn)


# ---------------------------------------------------------------------------
# Pure-XLA reference for correctness (eval-mode BN + conv + tanh01)
# ---------------------------------------------------------------------------
def _reference(params, x):
    bn = params["bn"]
    scale = bn["gamma"] / jnp.sqrt(bn["var"] + bn["eps"])
    shift = bn["beta"] - bn["mean"] * scale
    xa = jnp.maximum(x * scale[None, :, None, None] + shift[None, :, None, None], 0.0)
    y = jax.lax.conv_general_dilated(
        xa, params["w_conv"], window_strides=(1, 1), padding="SAME",
        dimension_numbers=("NCHW", "OIHW", "NCHW"),
        precision=jax.lax.Precision.HIGHEST)
    y = y + params["b_conv"][None, :, None, None]
    return (jnp.tanh(y) + 1.0) * 0.5


# ---------------------------------------------------------------------------
if __name__ == "__main__":
    key = jax.random.PRNGKey(0)
    kp, kx = jax.random.split(key)

    channels = 4
    params = init_params(kp, channels)
    x = jax.random.normal(kx, (2, channels, 16, 16), jnp.float32)   # NCHW input

    fwd = jax.jit(output_conv_forward)
    out = fwd(params, x)
    jax.block_until_ready(out)
    assert out.shape == (2, 3, 16, 16)

    ref = jax.jit(_reference)(params, x)
    jax.block_until_ready(ref)
    err = float(jnp.max(jnp.abs(out - ref)))
    assert err < 5e-3, f"mismatch vs XLA reference: {err}"

    print("KERNEL_OK")
</pallas_src>

<mosaic_0001>
module attributes {stable_mosaic.version = 11 : i64} {
  func.func @kernel(%arg0: i32, %arg1: memref<1x4x256xf32, #tpu.memory_space<vmem>>, %arg2: memref<4x1xf32, #tpu.memory_space<vmem>>, %arg3: memref<4x1xf32, #tpu.memory_space<vmem>>, %arg4: memref<9x8x4xf32, #tpu.memory_space<vmem>>, %arg5: memref<3x1xf32, #tpu.memory_space<vmem>>, %arg6: memref<1x3x256xf32, #tpu.memory_space<vmem>>) attributes {dimension_semantics = [#tpu.dimension_semantics<parallel>], iteration_bounds = array<i64: 2>, scalar_prefetch = 0 : i64, scratch_operands = 0 : i64, tpu.core_type = #tpu.core_type<tc>, window_params = [{transform_indices = @transform_0, window_bounds = array<i64: 1, 4, 256>}, {pipeline_mode = #tpu.pipeline_mode<synchronous>, transform_indices = @transform_1, window_bounds = array<i64: 4, 1>}, {pipeline_mode = #tpu.pipeline_mode<synchronous>, transform_indices = @transform_2, window_bounds = array<i64: 4, 1>}, {pipeline_mode = #tpu.pipeline_mode<synchronous>, transform_indices = @transform_3, window_bounds = array<i64: 9, 8, 4>}, {pipeline_mode = #tpu.pipeline_mode<synchronous>, transform_indices = @transform_4, window_bounds = array<i64: 3, 1>}, {transform_indices = @transform_5, window_bounds = array<i64: 1, 3, 256>}]} {
    %c0 = arith.constant 0 : index
    %c0_0 = arith.constant 0 : index
    %c0_1 = arith.constant 0 : index
    %0 = vector.load %arg1[%c0, %c0_0, %c0_1] : memref<1x4x256xf32, #tpu.memory_space<vmem>>, vector<1x4x256xf32>
    %1 = vector.shape_cast %0 : vector<1x4x256xf32> to vector<4x256xf32>
    %c0_2 = arith.constant 0 : index
    %c0_3 = arith.constant 0 : index
    %2 = vector.load %arg2[%c0_2, %c0_3] : memref<4x1xf32, #tpu.memory_space<vmem>>, vector<4x1xf32>
    %3 = vector.broadcast %2 : vector<4x1xf32> to vector<4x256xf32>
    %4 = arith.mulf %1, %3 : vector<4x256xf32>
    %c0_4 = arith.constant 0 : index
    %c0_5 = arith.constant 0 : index
    %5 = vector.load %arg3[%c0_4, %c0_5] : memref<4x1xf32, #tpu.memory_space<vmem>>, vector<4x1xf32>
    %6 = vector.broadcast %5 : vector<4x1xf32> to vector<4x256xf32>
    %7 = arith.addf %4, %6 : vector<4x256xf32>
    %cst = arith.constant 0.000000e+00 : f32
    %8 = vector.broadcast %cst : f32 to vector<4x256xf32>
    %9 = arith.maximumf %7, %8 : vector<4x256xf32>
    %10 = tpu.iota {dimensions = array<i32: 1>} : vector<1x256xi32>
    %c16_i32 = arith.constant 16 : i32
    %11 = vector.broadcast %c16_i32 : i32 to vector<1x256xi32>
    %12 = arith.remsi %10, %11 : vector<1x256xi32>
    %cst_6 = arith.constant 0.000000e+00 : f32
    %13 = vector.broadcast %cst_6 : f32 to vector<8x256xf32>
    %c17_i32 = arith.constant 17 : i32
    %14 = tpu.dynamic_rotate %9 by %c17_i32 dim 1 : vector<4x256xf32>, i32 -> vector<4x256xf32>
    %c16_i32_7 = arith.constant 16 : i32
    %15 = vector.broadcast %c16_i32_7 : i32 to vector<1x256xi32>
    %16 = arith.cmpi sge, %10, %15 : vector<1x256xi32>
    %c1_i32 = arith.constant 1 : i32
    %17 = vector.broadcast %c1_i32 : i32 to vector<1x256xi32>
    %18 = arith.cmpi sge, %12, %17 : vector<1x256xi32>
    %19 = arith.andi %16, %18 : vector<1x256xi1>
    %cst_8 = arith.constant 0.000000e+00 : f32
    %20 = vector.shape_cast %19 : vector<1x256xi1> to vector<1x256xi1>
    %21 = vector.broadcast %20 : vector<1x256xi1> to vector<4x256xi1>
    %22 = vector.broadcast %cst_8 : f32 to vector<4x256xf32>
    %23 = arith.select %21, %14, %22 : vector<4x256xi1>, vector<4x256xf32>
    %c0_9 = arith.constant 0 : index
    %c0_10 = arith.constant 0 : index
    %c0_11 = arith.constant 0 : index
    %24 = vector.load %arg4[%c0_9, %c0_10, %c0_11] : memref<9x8x4xf32, #tpu.memory_space<vmem>>, vector<1x8x4xf32>
    %25 = vector.shape_cast %24 : vector<1x8x4xf32> to vector<8x4xf32>
    %cst_12 = arith.constant dense<0.000000e+00> : vector<8x256xf32>
    %26 = tpu.matmul %25, %23, %cst_12 {dimension_numbers = #tpu.dot_dimension_numbers<[1], [0], [0], [1], [0, 0, 1, 1], [], []>} : vector<8x4xf32>, vector<4x256xf32>, vector<8x256xf32> -> vector<8x256xf32>
    %27 = arith.addf %13, %26 : vector<8x256xf32>
    %c16_i32_13 = arith.constant 16 : i32
    %28 = tpu.dynamic_rotate %9 by %c16_i32_13 dim 1 : vector<4x256xf32>, i32 -> vector<4x256xf32>
    %c16_i32_14 = arith.constant 16 : i32
    %29 = vector.broadcast %c16_i32_14 : i32 to vector<1x256xi32>
    %30 = arith.cmpi sge, %10, %29 : vector<1x256xi32>
    %cst_15 = arith.constant 0.000000e+00 : f32
    %31 = vector.shape_cast %30 : vector<1x256xi1> to vector<1x256xi1>
    %32 = vector.broadcast %31 : vector<1x256xi1> to vector<4x256xi1>
    %33 = vector.broadcast %cst_15 : f32 to vector<4x256xf32>
    %34 = arith.select %32, %28, %33 : vector<4x256xi1>, vector<4x256xf32>
    %c1 = arith.constant 1 : index
    %c0_16 = arith.constant 0 : index
    %c0_17 = arith.constant 0 : index
    %35 = vector.load %arg4[%c1, %c0_16, %c0_17] : memref<9x8x4xf32, #tpu.memory_space<vmem>>, vector<1x8x4xf32>
    %36 = vector.shape_cast %35 : vector<1x8x4xf32> to vector<8x4xf32>
    %cst_18 = arith.constant dense<0.000000e+00> : vector<8x256xf32>
    %37 = tpu.matmul %36, %34, %cst_18 {dimension_numbers = #tpu.dot_dimension_numbers<[1], [0], [0], [1], [0, 0, 1, 1], [], []>} : vector<8x4xf32>, vector<4x256xf32>, vector<8x256xf32> -> vector<8x256xf32>
    %38 = arith.addf %27, %37 : vector<8x256xf32>
    %c15_i32 = arith.constant 15 : i32
    %39 = tpu.dynamic_rotate %9 by %c15_i32 dim 1 : vector<4x256xf32>, i32 -> vector<4x256xf32>
    %c16_i32_19 = arith.constant 16 : i32
    %40 = vector.broadcast %c16_i32_19 : i32 to vector<1x256xi32>
    %41 = arith.cmpi sge, %10, %40 : vector<1x256xi32>
    %c14_i32 = arith.constant 14 : i32
    %42 = vector.broadcast %c14_i32 : i32 to vector<1x256xi32>
    %43 = arith.cmpi sle, %12, %42 : vector<1x256xi32>
    %44 = arith.andi %41, %43 : vector<1x256xi1>
    %cst_20 = arith.constant 0.000000e+00 : f32
    %45 = vector.shape_cast %44 : vector<1x256xi1> to vector<1x256xi1>
    %46 = vector.broadcast %45 : vector<1x256xi1> to vector<4x256xi1>
    %47 = vector.broadcast %cst_20 : f32 to vector<4x256xf32>
    %48 = arith.select %46, %39, %47 : vector<4x256xi1>, vector<4x256xf32>
    %c2 = arith.constant 2 : index
    %c0_21 = arith.constant 0 : index
    %c0_22 = arith.constant 0 : index
    %49 = vector.load %arg4[%c2, %c0_21, %c0_22] : memref<9x8x4xf32, #tpu.memory_space<vmem>>, vector<1x8x4xf32>
    %50 = vector.shape_cast %49 : vector<1x8x4xf32> to vector<8x4xf32>
    %cst_23 = arith.constant dense<0.000000e+00> : vector<8x256xf32>
    %51 = tpu.matmul %50, %48, %cst_23 {dimension_numbers = #tpu.dot_dimension_numbers<[1], [0], [0], [1], [0, 0, 1, 1], [], []>} : vector<8x4xf32>, vector<4x256xf32>, vector<8x256xf32> -> vector<8x256xf32>
    %52 = arith.addf %38, %51 : vector<8x256xf32>
    %c1_i32_24 = arith.constant 1 : i32
    %53 = tpu.dynamic_rotate %9 by %c1_i32_24 dim 1 : vector<4x256xf32>, i32 -> vector<4x256xf32>
    %c1_i32_25 = arith.constant 1 : i32
    %54 = vector.broadcast %c1_i32_25 : i32 to vector<1x256xi32>
    %55 = arith.cmpi sge, %12, %54 : vector<1x256xi32>
    %cst_26 = arith.constant 0.000000e+00 : f32
    %56 = vector.shape_cast %55 : vector<1x256xi1> to vector<1x256xi1>
    %57 = vector.broadcast %56 : vector<1x256xi1> to vector<4x256xi1>
    %58 = vector.broadcast %cst_26 : f32 to vector<4x256xf32>
    %59 = arith.select %57, %53, %58 : vector<4x256xi1>, vector<4x256xf32>
    %c3 = arith.constant 3 : index
    %c0_27 = arith.constant 0 : index
    %c0_28 = arith.constant 0 : index
    %60 = vector.load %arg4[%c3, %c0_27, %c0_28] : memref<9x8x4xf32, #tpu.memory_space<vmem>>, vector<1x8x4xf32>
    %61 = vector.shape_cast %60 : vector<1x8x4xf32> to vector<8x4xf32>
    %cst_29 = arith.constant dense<0.000000e+00> : vector<8x256xf32>
    %62 = tpu.matmul %61, %59, %cst_29 {dimension_numbers = #tpu.dot_dimension_numbers<[1], [0], [0], [1], [0, 0, 1, 1], [], []>} : vector<8x4xf32>, vector<4x256xf32>, vector<8x256xf32> -> vector<8x256xf32>
    %63 = arith.addf %52, %62 : vector<8x256xf32>
    %c4 = arith.constant 4 : index
    %c0_30 = arith.constant 0 : index
    %c0_31 = arith.constant 0 : index
    %64 = vector.load %arg4[%c4, %c0_30, %c0_31] : memref<9x8x4xf32, #tpu.memory_space<vmem>>, vector<1x8x4xf32>
    %65 = vector.shape_cast %64 : vector<1x8x4xf32> to vector<8x4xf32>
    %cst_32 = arith.constant dense<0.000000e+00> : vector<8x256xf32>
    %66 = tpu.matmul %65, %9, %cst_32 {dimension_numbers = #tpu.dot_dimension_numbers<[1], [0], [0], [1], [0, 0, 1, 1], [], []>} : vector<8x4xf32>, vector<4x256xf32>, vector<8x256xf32> -> vector<8x256xf32>
    %67 = arith.addf %63, %66 : vector<8x256xf32>
    %c255_i32 = arith.constant 255 : i32
    %68 = tpu.dynamic_rotate %9 by %c255_i32 dim 1 : vector<4x256xf32>, i32 -> vector<4x256xf32>
    %c14_i32_33 = arith.constant 14 : i32
    %69 = vector.broadcast %c14_i32_33 : i32 to vector<1x256xi32>
    %70 = arith.cmpi sle, %12, %69 : vector<1x256xi32>
    %cst_34 = arith.constant 0.000000e+00 : f32
    %71 = vector.shape_cast %70 : vector<1x256xi1> to vector<1x256xi1>
    %72 = vector.broadcast %71 : vector<1x256xi1> to vector<4x256xi1>
    %73 = vector.broadcast %cst_34 : f32 to vector<4x256xf32>
    %74 = arith.select %72, %68, %73 : vector<4x256xi1>, vector<4x256xf32>
    %c5 = arith.constant 5 : index
    %c0_35 = arith.constant 0 : index
    %c0_36 = arith.constant 0 : index
    %75 = vector.load %arg4[%c5, %c0_35, %c0_36] : memref<9x8x4xf32, #tpu.memory_space<vmem>>, vector<1x8x4xf32>
    %76 = vector.shape_cast %75 : vector<1x8x4xf32> to vector<8x4xf32>
    %cst_37 = arith.constant dense<0.000000e+00> : vector<8x256xf32>
    %77 = tpu.matmul %76, %74, %cst_37 {dimension_numbers = #tpu.dot_dimension_numbers<[1], [0], [0], [1], [0, 0, 1, 1], [], []>} : vector<8x4xf32>, vector<4x256xf32>, vector<8x256xf32> -> vector<8x256xf32>
    %78 = arith.addf %67, %77 : vector<8x256xf32>
    %c241_i32 = arith.constant 241 : i32
    %79 = tpu.dynamic_rotate %9 by %c241_i32 dim 1 : vector<4x256xf32>, i32 -> vector<4x256xf32>
    %c240_i32 = arith.constant 240 : i32
    %80 = vector.broadcast %c240_i32 : i32 to vector<1x256xi32>
    %81 = arith.cmpi slt, %10, %80 : vector<1x256xi32>
    %c1_i32_38 = arith.constant 1 : i32
    %82 = vector.broadcast %c1_i32_38 : i32 to vector<1x256xi32>
    %83 = arith.cmpi sge, %12, %82 : vector<1x256xi32>
    %84 = arith.andi %81, %83 : vector<1x256xi1>
    %cst_39 = arith.constant 0.000000e+00 : f32
    %85 = vector.shape_cast %84 : vector<1x256xi1> to vector<1x256xi1>
    %86 = vector.broadcast %85 : vector<1x256xi1> to vector<4x256xi1>
    %87 = vector.broadcast %cst_39 : f32 to vector<4x256xf32>
    %88 = arith.select %86, %79, %87 : vector<4x256xi1>, vector<4x256xf32>
    %c6 = arith.constant 6 : index
    %c0_40 = arith.constant 0 : index
    %c0_41 = arith.constant 0 : index
    %89 = vector.load %arg4[%c6, %c0_40, %c0_41] : memref<9x8x4xf32, #tpu.memory_space<vmem>>, vector<1x8x4xf32>
    %90 = vector.shape_cast %89 : vector<1x8x4xf32> to vector<8x4xf32>
    %cst_42 = arith.constant dense<0.000000e+00> : vector<8x256xf32>
    %91 = tpu.matmul %90, %88, %cst_42 {dimension_numbers = #tpu.dot_dimension_numbers<[1], [0], [0], [1], [0, 0, 1, 1], [], []>} : vector<8x4xf32>, vector<4x256xf32>, vector<8x256xf32> -> vector<8x256xf32>
    %92 = arith.addf %78, %91 : vector<8x256xf32>
    %c240_i32_43 = arith.constant 240 : i32
    %93 = tpu.dynamic_rotate %9 by %c240_i32_43 dim 1 : vector<4x256xf32>, i32 -> vector<4x256xf32>
    %c240_i32_44 = arith.constant 240 : i32
    %94 = vector.broadcast %c240_i32_44 : i32 to vector<1x256xi32>
    %95 = arith.cmpi slt, %10, %94 : vector<1x256xi32>
    %cst_45 = arith.constant 0.000000e+00 : f32
    %96 = vector.shape_cast %95 : vector<1x256xi1> to vector<1x256xi1>
    %97 = vector.broadcast %96 : vector<1x256xi1> to vector<4x256xi1>
    %98 = vector.broadcast %cst_45 : f32 to vector<4x256xf32>
    %99 = arith.select %97, %93, %98 : vector<4x256xi1>, vector<4x256xf32>
    %c7 = arith.constant 7 : index
    %c0_46 = arith.constant 0 : index
    %c0_47 = arith.constant 0 : index
    %100 = vector.load %arg4[%c7, %c0_46, %c0_47] : memref<9x8x4xf32, #tpu.memory_space<vmem>>, vector<1x8x4xf32>
    %101 = vector.shape_cast %100 : vector<1x8x4xf32> to vector<8x4xf32>
    %cst_48 = arith.constant dense<0.000000e+00> : vector<8x256xf32>
    %102 = tpu.matmul %101, %99, %cst_48 {dimension_numbers = #tpu.dot_dimension_numbers<[1], [0], [0], [1], [0, 0, 1, 1], [], []>} : vector<8x4xf32>, vector<4x256xf32>, vector<8x256xf32> -> vector<8x256xf32>
    %103 = arith.addf %92, %102 : vector<8x256xf32>
    %c239_i32 = arith.constant 239 : i32
    %104 = tpu.dynamic_rotate %9 by %c239_i32 dim 1 : vector<4x256xf32>, i32 -> vector<4x256xf32>
    %c240_i32_49 = arith.constant 240 : i32
    %105 = vector.broadcast %c240_i32_49 : i32 to vector<1x256xi32>
    %106 = arith.cmpi slt, %10, %105 : vector<1x256xi32>
    %c14_i32_50 = arith.constant 14 : i32
    %107 = vector.broadcast %c14_i32_50 : i32 to vector<1x256xi32>
    %108 = arith.cmpi sle, %12, %107 : vector<1x256xi32>
    %109 = arith.andi %106, %108 : vector<1x256xi1>
    %cst_51 = arith.constant 0.000000e+00 : f32
    %110 = vector.shape_cast %109 : vector<1x256xi1> to vector<1x256xi1>
    %111 = vector.broadcast %110 : vector<1x256xi1> to vector<4x256xi1>
    %112 = vector.broadcast %cst_51 : f32 to vector<4x256xf32>
    %113 = arith.select %111, %104, %112 : vector<4x256xi1>, vector<4x256xf32>
    %c8 = arith.constant 8 : index
    %c0_52 = arith.constant 0 : index
    %c0_53 = arith.constant 0 : index
    %114 = vector.load %arg4[%c8, %c0_52, %c0_53] : memref<9x8x4xf32, #tpu.memory_space<vmem>>, vector<1x8x4xf32>
    %115 = vector.shape_cast %114 : vector<1x8x4xf32> to vector<8x4xf32>
    %cst_54 = arith.constant dense<0.000000e+00> : vector<8x256xf32>
    %116 = tpu.matmul %115, %113, %cst_54 {dimension_numbers = #tpu.dot_dimension_numbers<[1], [0], [0], [1], [0, 0, 1, 1], [], []>} : vector<8x4xf32>, vector<4x256xf32>, vector<8x256xf32> -> vector<8x256xf32>
    %117 = arith.addf %103, %116 : vector<8x256xf32>
    %118 = vector.extract_strided_slice %117 {offsets = [0, 0], sizes = [3, 256], strides = [1, 1]} : vector<8x256xf32> to vector<3x256xf32>
    %c0_55 = arith.constant 0 : index
    %c0_56 = arith.constant 0 : index
    %119 = vector.load %arg5[%c0_55, %c0_56] : memref<3x1xf32, #tpu.memory_space<vmem>>, vector<3x1xf32>
    %120 = vector.broadcast %119 : vector<3x1xf32> to vector<3x256xf32>
    %121 = arith.addf %118, %120 : vector<3x256xf32>
    %122 = math.tanh %121 : vector<3x256xf32>
    %cst_57 = arith.constant 5.000000e-01 : f32
    %123 = vector.broadcast %cst_57 : f32 to vector<3x256xf32>
    %124 = arith.mulf %122, %123 : vector<3x256xf32>
    %cst_58 = arith.constant 5.000000e-01 : f32
    %125 = vector.broadcast %cst_58 : f32 to vector<3x256xf32>
    %126 = arith.addf %124, %125 : vector<3x256xf32>
    %c0_59 = arith.constant 0 : index
    %c0_60 = arith.constant 0 : index
    %c0_61 = arith.constant 0 : index
    %127 = vector.load %arg6[%c0_59, %c0_60, %c0_61] : memref<1x3x256xf32, #tpu.memory_space<vmem>>, vector<1x3x256xf32>
    %128 = vector.shape_cast %127 : vector<1x3x256xf32> to vector<3x256xf32>
    %129 = vector.shape_cast %126 : vector<3x256xf32> to vector<1x3x256xf32>
    tpu.vector_store %arg6[%c0_59, %c0_60, %c0_61], %129 {strides = array<i32>} : memref<1x3x256xf32, #tpu.memory_space<vmem>>, vector<1x3x256xf32>,
    return
  }
  func.func @transform_0(%arg0: i32) -> (i32, i32, i32) {
    %c0_i32 = arith.constant 0 : i32
    %c0_i32_0 = arith.constant 0 : i32
    %c0_i32_1 = arith.constant 0 : i32
    return %arg0, %c0_i32, %c0_i32_0 : i32, i32, i32
  }
  func.func @transform_1(%arg0: i32) -> (i32, i32) {
    %c0_i32 = arith.constant 0 : i32
    %c0_i32_0 = arith.constant 0 : i32
    %c0_i32_1 = arith.constant 0 : i32
    return %c0_i32, %c0_i32_0 : i32, i32
  }
  func.func @transform_2(%arg0: i32) -> (i32, i32) {
    %c0_i32 = arith.constant 0 : i32
    %c0_i32_0 = arith.constant 0 : i32
    %c0_i32_1 = arith.constant 0 : i32
    return %c0_i32, %c0_i32_0 : i32, i32
  }
  func.func @transform_3(%arg0: i32) -> (i32, i32, i32) {
    %c0_i32 = arith.constant 0 : i32
    %c0_i32_0 = arith.constant 0 : i32
    %c0_i32_1 = arith.constant 0 : i32
    %c0_i32_2 = arith.constant 0 : i32
    return %c0_i32, %c0_i32_0, %c0_i32_1 : i32, i32, i32
  }
  func.func @transform_4(%arg0: i32) -> (i32, i32) {
    %c0_i32 = arith.constant 0 : i32
    %c0_i32_0 = arith.constant 0 : i32
    %c0_i32_1 = arith.constant 0 : i32
    return %c0_i32, %c0_i32_0 : i32, i32
  }
  func.func @transform_5(%arg0: i32) -> (i32, i32, i32) {
    %c0_i32 = arith.constant 0 : i32
    %c0_i32_0 = arith.constant 0 : i32
    %c0_i32_1 = arith.constant 0 : i32
    return %arg0, %c0_i32, %c0_i32_0 : i32, i32, i32
  }
}

</mosaic_0001>

<llo_original>
// kernel: output_conv_forward.1
$region0: #{output_conv_forward.1}
  #allocation0 [shape = 'u32[]', space=smem, size = 0x4, offset = 0x4, fixed_abs, tag = 'smem constant byte address 0x4 - core index']
  #allocation1 [shape = 'u32[72,128]{1,0:T(1,128)}', space=vmem, size = 0x9000, scoped, tag = 'internal scratch']
  %s0 = inlined_call_operand.vmem [shape: f32[2,4,256], index: 0, kind: input, shape index: {}]
  %s1 = inlined_call_operand.vmem [shape: f32[4,1], index: 1, kind: input, shape index: {}]
  %s2 = inlined_call_operand.vmem [shape: f32[4,1], index: 2, kind: input, shape index: {}]
  %s3 = inlined_call_operand.vmem [shape: f32[9,8,4], index: 3, kind: input, shape index: {}]
  %s4 = inlined_call_operand.vmem [shape: f32[3,1], index: 4, kind: input, shape index: {}]
  %s5 = inlined_call_operand.vmem [shape: f32[2,3,256], index: 5, kind: output, shape index: {}]
  %s6 = sld [smem:[#allocation0]]
  $region53: #{output_conv_forward.1} parent=0
    _
  %s8 = ssub.s32 1, %s6
  %s9 = scalar_select 0, %s8, %s6
  loop: start=0, step=1, limit=4
  $region2: #{output_conv_forward.1} parent=0 // loop_pre_header
    _
  $region3: #{output_conv_forward.1} parent=0 // loop_header
    %s11 = sphi 0, %s15
    %p12 = scmp.ge.s32.totalorder %s11, 4
    %s21 = sphi 0, %s23
    %s24 = sphi 0, %s21
    %s25 = sphi 0, %s24
    %s41 = sphi 0, %s25
    %s45 = sphi 0, %s45
    %s47 = sphi 0, %s45
    %s48 = sphi 0, %s47
    %s62 = sphi 0, %s48
    %s66 = sphi 0, %s66
    %s68 = sphi 0, %s66
    %s69 = sphi 0, %s68
    %s83 = sphi 0, %s69
    %s87 = sphi 0, %s87
    %s89 = sphi 0, %s87
    %s90 = sphi 0, %s89
    %s104 = sphi 0, %s90
    %s108 = sphi 0, %s108
    %s110 = sphi 0, %s108
    %s111 = sphi 0, %s110
    %s125 = sphi 0, %s111
    %s131 = sphi 0, %s133
    %s134 = sphi 0, %s131
    %s135 = sphi 0, %s134
    %s151 = sphi 0, %s135
  $region4: #{output_conv_forward.1} parent=0 // loop_header_branch
    %14 = sbr.rel (%p12) target = $region8
  $region5: #{output_conv_forward.1} parent=0 // loop_body
    %s16 = ssub.s32 %s11, 1
    %s17 = ssub.s32 %s11, 2
    %s18 = sadd.s32 %s11, 1
    %s19 = ssub.s32 %s11, %s18
    %p20 = scmp.eq.s32.totalorder %s19, 0
    %s22 = sadd.s32 %s21, 1
    %s23 = scalar_select %p20, %s21, %s22
    %p26 = pneg %p20
    %p27 = scmp.eq.s32.totalorder %s11, 1
    %p28 = por %p26, %p27
    %p29 = scmp.ne.s32.totalorder %s21, %s24
    %p30 = scmp.eq.s32.totalorder %s11, 0
    %p31 = por %p29, %p30
    %p32 = scmp.ne.s32.totalorder %s21, %s24
    %p33 = scmp.eq.s32.totalorder %s16, 1
    %p34 = por %p32, %p33
    %p35 = scmp.ne.s32.totalorder %s24, %s25
    %p36 = scmp.eq.s32.totalorder %s16, 0
    %p37 = por %p35, %p36
    %p38 = scmp.ne.s32.totalorder %s24, %s25
    %p39 = scmp.eq.s32.totalorder %s17, 1
    %p40 = por %p38, %p39
    %p42 = scmp.ne.s32.totalorder %s25, %s41
    %p43 = scmp.eq.s32.totalorder %s17, 0
    %p44 = por %p42, %p43
    %s46 = sadd.s32 %s45, 1
    %p49 = scmp.eq.s32.totalorder %s11, 1
    %p50 = scmp.ne.s32.totalorder %s45, %s47
    %p51 = scmp.eq.s32.totalorder %s11, 0
    %p52 = por %p50, %p51
    %p53 = scmp.ne.s32.totalorder %s45, %s47
    %p54 = scmp.eq.s32.totalorder %s16, 1
    %p55 = por %p53, %p54
    %p56 = scmp.ne.s32.totalorder %s47, %s48
    %p57 = scmp.eq.s32.totalorder %s16, 0
    %p58 = por %p56, %p57
    %p59 = scmp.ne.s32.totalorder %s47, %s48
    %p60 = scmp.eq.s32.totalorder %s17, 1
    %p61 = por %p59, %p60
    %p63 = scmp.ne.s32.totalorder %s48, %s62
    %p64 = scmp.eq.s32.totalorder %s17, 0
    %p65 = por %p63, %p64
    %s67 = sadd.s32 %s66, 1
    %p70 = scmp.eq.s32.totalorder %s11, 1
    %p71 = scmp.ne.s32.totalorder %s66, %s68
    %p72 = scmp.eq.s32.totalorder %s11, 0
    %p73 = por %p71, %p72
    %p74 = scmp.ne.s32.totalorder %s66, %s68
    %p75 = scmp.eq.s32.totalorder %s16, 1
    %p76 = por %p74, %p75
    %p77 = scmp.ne.s32.totalorder %s68, %s69
    %p78 = scmp.eq.s32.totalorder %s16, 0
    %p79 = por %p77, %p78
    %p80 = scmp.ne.s32.totalorder %s68, %s69
    %p81 = scmp.eq.s32.totalorder %s17, 1
    %p82 = por %p80, %p81
    %p84 = scmp.ne.s32.totalorder %s69, %s83
    %p85 = scmp.eq.s32.totalorder %s17, 0
    %p86 = por %p84, %p85
    %s88 = sadd.s32 %s87, 1
    %p91 = scmp.eq.s32.totalorder %s11, 1
    %p92 = scmp.ne.s32.totalorder %s87, %s89
    %p93 = scmp.eq.s32.totalorder %s11, 0
    %p94 = por %p92, %p93
    %p95 = scmp.ne.s32.totalorder %s87, %s89
    %p96 = scmp.eq.s32.totalorder %s16, 1
    %p97 = por %p95, %p96
    %p98 = scmp.ne.s32.totalorder %s89, %s90
    %p99 = scmp.eq.s32.totalorder %s16, 0
    %p100 = por %p98, %p99
    %p101 = scmp.ne.s32.totalorder %s89, %s90
    %p102 = scmp.eq.s32.totalorder %s17, 1
    %p103 = por %p101, %p102
    %p105 = scmp.ne.s32.totalorder %s90, %s104
    %p106 = scmp.eq.s32.totalorder %s17, 0
    %p107 = por %p105, %p106
    %s109 = sadd.s32 %s108, 1
    %p112 = scmp.eq.s32.totalorder %s11, 1
    %p113 = scmp.ne.s32.totalorder %s108, %s110
    %p114 = scmp.eq.s32.totalorder %s11, 0
    %p115 = por %p113, %p114
    %p116 = scmp.ne.s32.totalorder %s108, %s110
    %p117 = scmp.eq.s32.totalorder %s16, 1
    %p118 = por %p116, %p117
    %p119 = scmp.ne.s32.totalorder %s110, %s111
    %p120 = scmp.eq.s32.totalorder %s16, 0
    %p121 = por %p119, %p120
    %p122 = scmp.ne.s32.totalorder %s110, %s111
    %p123 = scmp.eq.s32.totalorder %s17, 1
    %p124 = por %p122, %p123
    %p126 = scmp.ne.s32.totalorder %s111, %s125
    %p127 = scmp.eq.s32.totalorder %s17, 0
    %p128 = por %p126, %p127
    %s129 = ssub.s32 %s11, %s18
    %p130 = scmp.eq.s32.totalorder %s129, 0
    %s132 = sadd.s32 %s131, 1
    %s133 = scalar_select %p130, %s131, %s132
    %p136 = pneg %p130
    %p137 = scmp.eq.s32.totalorder %s11, 1
    %p138 = por %p136, %p137
    %p139 = scmp.ne.s32.totalorder %s131, %s134
    %p140 = scmp.eq.s32.totalorder %s11, 0
    %p141 = por %p139, %p140
    %p142 = scmp.ne.s32.totalorder %s131, %s134
    %p143 = scmp.eq.s32.totalorder %s16, 1
    %p144 = por %p142, %p143
    %p145 = scmp.ne.s32.totalorder %s134, %s135
    %p146 = scmp.eq.s32.totalorder %s16, 0
    %p147 = por %p145, %p146
    %p148 = scmp.ne.s32.totalorder %s134, %s135
    %p149 = scmp.eq.s32.totalorder %s17, 1
    %p150 = por %p148, %p149
    %p152 = scmp.ne.s32.totalorder %s135, %s151
    %p153 = scmp.eq.s32.totalorder %s17, 0
    %p154 = por %p152, %p153
    %p155 = scmp.le.s32.totalorder 1, %s11
    %p156 = scmp.lt.s32.totalorder %s11, 3
    %p157 = pnand %p155, %p156
    %p158 = pneg %p157
    // Predicated region
    $region9: #{output_conv_forward.1} parent=5 // pred_check
      _
    $region10: #{output_conv_forward.1} parent=5 // pred_check_branch
      %160 = sbr.rel (%p157) target = $region12
    $region11: #{output_conv_forward.1} parent=5 // pred_region
      %s161 = ssub.s32 %s11, 1
      // Predicated region
      $region13: #{output_conv_forward.1} parent=11 // pred_check
        %p162 = pneg %p58
      $region14: #{output_conv_forward.1} parent=11 // pred_check_branch
        %164 = sbr.rel (%p162) target = $region16
      $region15: #{output_conv_forward.1} parent=11 // pred_region
        _
      $region16: #{output_conv_forward.1} parent=11 // pred_fallthru
        _
      // Predicated region
      $region17: #{output_conv_forward.1} parent=11 // pred_check
        %p165 = pneg %p79
      $region18: #{output_conv_forward.1} parent=11 // pred_check_branch
        %167 = sbr.rel (%p165) target = $region20
      $region19: #{output_conv_forward.1} parent=11 // pred_region
        _
      $region20: #{output_conv_forward.1} parent=11 // pred_fallthru
        _
      // Predicated region
      $region21: #{output_conv_forward.1} parent=11 // pred_check
        %p168 = pneg %p100
      $region22: #{output_conv_forward.1} parent=11 // pred_check_branch
        %170 = sbr.rel (%p168) target = $region24
      $region23: #{output_conv_forward.1} parent=11 // pred_region
        _
      $region24: #{output_conv_forward.1} parent=11 // pred_fallthru
        _
      // Predicated region
      $region25: #{output_conv_forward.1} parent=11 // pred_check
        %p171 = pneg %p121
      $region26: #{output_conv_forward.1} parent=11 // pred_check_branch
        %173 = sbr.rel (%p171) target = $region28
      $region27: #{output_conv_forward.1} parent=11 // pred_region
        _
      $region28: #{output_conv_forward.1} parent=11 // pred_fallthru
        _
    $region12: #{output_conv_forward.1} parent=5 // pred_fallthru
      _
    %p174 = scmp.lt.s32.totalorder %s11, 2
    // Predicated region
    $region29: #{output_conv_forward.1} parent=5 // pred_check
      %p175 = pneg %p174
    $region30: #{output_conv_forward.1} parent=5 // pred_check_branch
      %177 = sbr.rel (%p175) target = $region32
    $region31: #{output_conv_forward.1} parent=5 // pred_region
      // Predicated region
      $region33: #{output_conv_forward.1} parent=31 // pred_check
        %p178 = pneg %p31
      $region34: #{output_conv_forward.1} parent=31 // pred_check_branch
        %180 = sbr.rel (%p178) target = $region36
      $region35: #{output_conv_forward.1} parent=31 // pred_region
        %p181 = scmp.lt.s32.totalorder %s11, 1
        %s182 = scalar_select %p181, %s11, 1
        %s183 = smul.addr %s182, 2
        %s184 = smul.addr %s183, 4
        %s185 = scalar_lea.vmem %s0, %s184
      $region36: #{output_conv_forward.1} parent=31 // pred_fallthru
        _
    $region32: #{output_conv_forward.1} parent=5 // pred_fallthru
      _
    %p186 = scmp.le.s32.totalorder 1, %s11
    %p187 = scmp.lt.s32.totalorder %s11, 3
    %p188 = pnand %p186, %p187
    %p189 = pneg %p188
    // Predicated region
    $region37: #{output_conv_forward.1} parent=5 // pred_check
      _
    $region38: #{output_conv_forward.1} parent=5 // pred_check_branch
      %191 = sbr.rel (%p188) target = $region40
    $region39: #{output_conv_forward.1} parent=5 // pred_region
      %s192 = ssub.s32 %s11, 1
      %p193 = scmp.lt.s32.totalorder %s16, 1
      %s194 = scalar_select %p193, %s16, 1
      %s195 = smul.addr %s194, 2
      %s196 = smul.addr %s195, 4
      %s197 = scalar_lea.vmem %s0, %s196
      %p198 = pneg %p37
      %p199 = pneg %p34
      %p200 = pneg %p58
      %p201 = pneg %p55
      %p202 = pneg %p79
      %p203 = pneg %p76
      %p204 = pneg %p100
      %p205 = pneg %p97
      %p206 = pneg %p121
      %p207 = pneg %p118
      %p208 = pneg %p147
      %p209 = pneg %p144
      %p210 = scmp.lt.s32.totalorder %s16, 1
      %s211 = scalar_select %p210, %s16, 1
      %s212 = smul.addr %s211, 2
      %s213 = smul.addr %s212, 4
      %s214 = scalar_lea.vmem %s5, %s213
      %p215 = scmp.lt.s32.totalorder %s16, 1
      %s216 = scalar_select %p215, %s16, 1
      %s217 = smul.addr %s216, 2
      %s218 = smul.addr %s217, 4
      %s219 = scalar_lea.vmem %s0, %s218
      %p220 = scmp.lt.s32.totalorder %s16, 1
      %s221 = scalar_select %p220, %s16, 1
      %s222 = smul.addr %s221, 2
      %s223 = smul.addr %s222, 4
      %s224 = scalar_lea.vmem %s5, %s223
      %v225 = vld [vmem:[%s219] sm:$0xff]
      %v226 = vld [vmem:[%s1] sm:$0xf]
      %228 = vset.pattern.permute.xlu0 0
      %229 = vperm.xlu0 %228, %v226
      %v230 = vpop.permute.xlu0 %229
      %v232 = vunpack.c.l.s4 839922192
      %v233 = vunpack.c.0.s8 %v232
      %v234 = vperm.slane %v230, %v233
      %v236 = vmul.f32 %v225, %v234
      %v237 = vld [vmem:[%s2] sm:$0xf]
      %239 = vset.pattern.permute.xlu0 0
      %240 = vperm.xlu0 %239, %v237
      %v241 = vpop.permute.xlu0 %240
      %v243 = vunpack.c.l.s4 839922192
      %v244 = vunpack.c.0.s8 %v243
      %v245 = vperm.slane %v241, %v244
      %v247 = vadd.f32 %v236, %v245
      %v248 = vmax.f32 %v247, 0.0
      %v249 = vlaneseq
      %v250 = vand.u32 %v249, 127
      %v251 = vadd.s32 %v250, 128
      %vm252 = vcmp.lt.s32.totalorder %v250, 0
      %v253 = vsub.s32 0, %v250
      %v254 = vsel %vm252, %v253, %v250
      %v255 = vshrl.u32 %v254, 4
      %v256 = vand.u32 %v254, 15
      %v257 = vsub.s32 0, %v256
      %v258 = vsel %vm252, %v257, %v256
      %vm259 = vcmp.lt.s32.totalorder %v251, 0
      %v260 = vsub.s32 0, %v251
      %v261 = vsel %vm259, %v260, %v251
      %v262 = vshrl.u32 %v261, 4
      %v263 = vand.u32 %v261, 15
      %v264 = vsub.s32 0, %v263
      %v265 = vsel %vm259, %v264, %v263
      %267 = vst [vmem:[#allocation1] ss:$2 sm:$0xff] %v248
      %v268 = vld.sshfl [vmem:[#allocation1] sm:$0xff pattern:$0x75316420]
      %v269 = vld.sshfl [vmem:[#allocation1 + $0x8] sm:$0xff pattern:$0x75316420]
      %272 = vrot.lane.b32.xlu0 %v268, 17
      %v273 = vpop.permute.xlu0 %272
      %274 = vrot.lane.b32.xlu0 %v269, 17
      %v275 = vpop.permute.xlu0 %274
      %vm276 = vcmp.lt.s32.totalorder %v250, 17
      %v277 = vsel %vm276, %v273, %v275
      %v278 = vsel %vm276, %v275, %v273
      %vm279 = vcmp.ge.s32.totalorder %v250, 16
      %vm280 = vcmp.ge.s32.totalorder %v251, 16
      %vm281 = vcmp.ge.s32.totalorder %v258, 1
      %vm282 = vcmp.ge.s32.totalorder %v265, 1
      %vm283 = vmand %vm279, %vm281
      %vm284 = vmand %vm280, %vm282
      %v285 = vsel %vm283, 1, 0
      %v286 = vsel %vm284, 1, 0
      %vm287 = vcmp.eq.s32.totalorder %v285, 1
      %vm288 = vcmp.eq.s32.totalorder %v286, 1
      %v289 = vsel %vm287, %v278, 0.0
      %v290 = vsel %vm288, %v277, 0.0
      %v291 = vld [vmem:[%s3] sm:$0xff]
      %292 = vst [vmem:[#allocation1] ss:$2 sm:$0xff] %v248
      %v293 = vld.sshfl [vmem:[#allocation1] sm:$0xff pattern:$0x75316420]
      %v294 = vld.sshfl [vmem:[#allocation1 + $0x8] sm:$0xff pattern:$0x75316420]
      %297 = vrot.lane.b32.xlu0 %v293, 16
      %v298 = vpop.permute.xlu0 %297
      %299 = vrot.lane.b32.xlu0 %v294, 16
      %v300 = vpop.permute.xlu0 %299
      %vm301 = vcmp.lt.s32.totalorder %v250, 16
      %v302 = vsel %vm301, %v298, %v300
      %v303 = vsel %vm301, %v300, %v298
      %v304 = vsel %vm279, 1, 0
      %v305 = vsel %vm280, 1, 0
      %vm306 = vcmp.eq.s32.totalorder %v304, 1
      %vm307 = vcmp.eq.s32.totalorder %v305, 1
      %v308 = vsel %vm306, %v303, 0.0
      %v309 = vsel %vm307, %v302, 0.0
      %s310 = scalar_lea.vmem %s3, 8
      %v311 = vld [vmem:[%s310] sm:$0xff]
      %vm312 = vcmask 31744
      %v314 = vsel %vm312, %v311, 0
      %vm316 = vcmask 1043456
      %v318 = vsel %vm316, %v308, 0
      %v321 = vsel %vm316, %v309, 0
      %323 = vmatpush.msra.mxu0 0.0
      %324 = vmatpush.msra.mxu0 0.0
      %325 = vmatpush.msra.mxu0 0.0
      %326 = vmatpush.msra.mxu0 0.0
      %327 = vmatpush.msra.mxu0 0.0
      %328 = vmatpush.msra.mxu0 0.0
      %329 = vmatpush.msra.mxu0 0.0
      %330 = vmatpush.msra.mxu0 0.0
      %331 = vmatpush.msra.mxu0 0.0
      %332 = vmatpush.msra.mxu0 0.0
      %333 = vmatpush.msra.mxu0 0.0
      %334 = vmatpush.msra.mxu0 0.0
      %335 = vmatpush.msra.mxu0 0.0
      %336 = vmatpush.msra.mxu0 0.0
      %337 = vmatpush.msra.mxu0 0.0
      %338 = vmatpush.msra.mxu0 %v318
      %339 = vmatmul.f32.gmra.mxu0 %v314
      %v340 = vpop.f32.mrf.mxu0
      %v341 = vadd.f32 0.0, %v340
      %342 = vdwg.mxu0
      %343 = vmatpush.msra.mxu0 0.0
      %344 = vmatpush.msra.mxu0 0.0
      %345 = vmatpush.msra.mxu0 0.0
      %346 = vmatpush.msra.mxu0 0.0
      %347 = vmatpush.msra.mxu0 0.0
      %348 = vmatpush.msra.mxu0 0.0
      %349 = vmatpush.msra.mxu0 0.0
      %350 = vmatpush.msra.mxu0 0.0
      %351 = vmatpush.msra.mxu0 0.0
      %352 = vmatpush.msra.mxu0 0.0
      %353 = vmatpush.msra.mxu0 0.0
      %354 = vmatpush.msra.mxu0 0.0
      %355 = vmatpush.msra.mxu0 0.0
      %356 = vmatpush.msra.mxu0 0.0
      %357 = vmatpush.msra.mxu0 0.0
      %358 = vmatpush.msra.mxu0 %v321
      %359 = vmatmul.f32.gmra.mxu0 %v314
      %v360 = vpop.f32.mrf.mxu0
      %v361 = vadd.f32 0.0, %v360
      %362 = vdwg.mxu0
      %v364 = vsel %vm312, %v291, 0
      %v367 = vsel %vm316, %v289, 0
      %v370 = vsel %vm316, %v290, 0
      %372 = vmatpush.msra.mxu0 0.0
      %373 = vmatpush.msra.mxu0 0.0
      %374 = vmatpush.msra.mxu0 0.0
      %375 = vmatpush.msra.mxu0 0.0
      %376 = vmatpush.msra.mxu0 0.0
      %377 = vmatpush.msra.mxu0 0.0
      %378 = vmatpush.msra.mxu0 0.0
      %379 = vmatpush.msra.mxu0 0.0
      %380 = vmatpush.msra.mxu0 0.0
      %381 = vmatpush.msra.mxu0 0.0
      %382 = vmatpush.msra.mxu0 0.0
      %383 = vmatpush.msra.mxu0 0.0
      %384 = vmatpush.msra.mxu0 0.0
      %385 = vmatpush.msra.mxu0 0.0
      %386 = vmatpush.msra.mxu0 0.0
      %387 = vmatpush.msra.mxu0 %v367
      %388 = vmatmul.f32.gmra.mxu0 %v364
      %v389 = vpop.f32.mrf.mxu0
      %v390 = vadd.f32 %v341, %v389
      %391 = vdwg.mxu0
      %392 = vmatpush.msra.mxu0 0.0
      %393 = vmatpush.msra.mxu0 0.0
      %394 = vmatpush.msra.mxu0 0.0
      %395 = vmatpush.msra.mxu0 0.0
      %396 = vmatpush.msra.mxu0 0.0
      %397 = vmatpush.msra.mxu0 0.0
      %398 = vmatpush.msra.mxu0 0.0
      %399 = vmatpush.msra.mxu0 0.0
      %400 = vmatpush.msra.mxu0 0.0
      %401 = vmatpush.msra.mxu0 0.0
      %402 = vmatpush.msra.mxu0 0.0
      %403 = vmatpush.msra.mxu0 0.0
      %404 = vmatpush.msra.mxu0 0.0
      %405 = vmatpush.msra.mxu0 0.0
      %406 = vmatpush.msra.mxu0 0.0
      %407 = vmatpush.msra.mxu0 %v370
      %408 = vmatmul.f32.gmra.mxu0 %v364
      %v409 = vpop.f32.mrf.mxu0
      %v410 = vadd.f32 %v361, %v409
      %411 = vdwg.mxu0
      %412 = vst [vmem:[#allocation1] ss:$2 sm:$0xff] %v248
      %v413 = vld.sshfl [vmem:[#allocation1] sm:$0xff pattern:$0x75316420]
      %v414 = vld.sshfl [vmem:[#allocation1 + $0x8] sm:$0xff pattern:$0x75316420]
      %417 = vrot.lane.b32.xlu0 %v413, 15
      %v418 = vpop.permute.xlu0 %417
      %419 = vrot.lane.b32.xlu0 %v414, 15
      %v420 = vpop.permute.xlu0 %419
      %vm421 = vcmp.lt.s32.totalorder %v250, 15
      %v422 = vsel %vm421, %v418, %v420
      %v423 = vsel %vm421, %v420, %v418
      %vm424 = vcmp.le.s32.totalorder %v258, 14
      %vm425 = vcmp.le.s32.totalorder %v265, 14
      %vm426 = vmand %vm279, %vm424
      %vm427 = vmand %vm280, %vm425
      %v428 = vsel %vm426, 1, 0
      %v429 = vsel %vm427, 1, 0
      %vm430 = vcmp.eq.s32.totalorder %v428, 1
      %vm431 = vcmp.eq.s32.totalorder %v429, 1
      %v432 = vsel %vm430, %v423, 0.0
      %v433 = vsel %vm431, %v422, 0.0
      %s434 = scalar_lea.vmem %s3, 16
      %v435 = vld [vmem:[%s434] sm:$0xff]
      %v437 = vsel %vm312, %v435, 0
      %v440 = vsel %vm316, %v432, 0
      %v443 = vsel %vm316, %v433, 0
      %445 = vmatpush.msra.mxu0 0.0
      %446 = vmatpush.msra.mxu0 0.0
      %447 = vmatpush.msra.mxu0 0.0
      %448 = vmatpush.msra.mxu0 0.0
      %449 = vmatpush.msra.mxu0 0.0
      %450 = vmatpush.msra.mxu0 0.0
      %451 = vmatpush.msra.mxu0 0.0
      %452 = vmatpush.msra.mxu0 0.0
      %453 = vmatpush.msra.mxu0 0.0
      %454 = vmatpush.msra.mxu0 0.0
      %455 = vmatpush.msra.mxu0 0.0
      %456 = vmatpush.msra.mxu0 0.0
      %457 = vmatpush.msra.mxu0 0.0
      %458 = vmatpush.msra.mxu0 0.0
      %459 = vmatpush.msra.mxu0 0.0
      %460 = vmatpush.msra.mxu0 %v440
      %461 = vmatmul.f32.gmra.mxu0 %v437
      %v462 = vpop.f32.mrf.mxu0
      %v463 = vadd.f32 0.0, %v462
      %464 = vdwg.mxu0
      %465 = vmatpush.msra.mxu0 0.0
      %466 = vmatpush.msra.mxu0 0.0
      %467 = vmatpush.msra.mxu0 0.0
      %468 = vmatpush.msra.mxu0 0.0
      %469 = vmatpush.msra.mxu0 0.0
      %470 = vmatpush.msra.mxu0 0.0
      %471 = vmatpush.msra.mxu0 0.0
      %472 = vmatpush.msra.mxu0 0.0
      %473 = vmatpush.msra.mxu0 0.0
      %474 = vmatpush.msra.mxu0 0.0
      %475 = vmatpush.msra.mxu0 0.0
      %476 = vmatpush.msra.mxu0 0.0
      %477 = vmatpush.msra.mxu0 0.0
      %478 = vmatpush.msra.mxu0 0.0
      %479 = vmatpush.msra.mxu0 0.0
      %480 = vmatpush.msra.mxu0 %v443
      %481 = vmatmul.f32.gmra.mxu0 %v437
      %v482 = vpop.f32.mrf.mxu0
      %v483 = vadd.f32 0.0, %v482
      %484 = vdwg.mxu0
      %v485 = vadd.f32 %v390, %v463
      %v486 = vadd.f32 %v410, %v483
      %487 = vst [vmem:[#allocation1] ss:$2 sm:$0xff] %v248
      %v488 = vld.sshfl [vmem:[#allocation1] sm:$0xff pattern:$0x75316420]
      %v489 = vld.sshfl [vmem:[#allocation1 + $0x8] sm:$0xff pattern:$0x75316420]
      %492 = vrot.lane.b32.xlu0 %v488, 1
      %v493 = vpop.permute.xlu0 %492
      %494 = vrot.lane.b32.xlu0 %v489, 1
      %v495 = vpop.permute.xlu0 %494
      %vm496 = vcmp.lt.s32.totalorder %v250, 1
      %v497 = vsel %vm496, %v493, %v495
      %v498 = vsel %vm496, %v495, %v493
      %v499 = vsel %vm281, 1, 0
      %v500 = vsel %vm282, 1, 0
      %vm501 = vcmp.eq.s32.totalorder %v499, 1
      %vm502 = vcmp.eq.s32.totalorder %v500, 1
      %v503 = vsel %vm501, %v498, 0.0
      %v504 = vsel %vm502, %v497, 0.0
      %s505 = scalar_lea.vmem %s3, 24
      %v506 = vld [vmem:[%s505] sm:$0xff]
      %v508 = vsel %vm312, %v506, 0
      %v511 = vsel %vm316, %v503, 0
      %v514 = vsel %vm316, %v504, 0
      %516 = vmatpush.msra.mxu0 0.0
      %517 = vmatpush.msra.mxu0 0.0
      %518 = vmatpush.msra.mxu0 0.0
      %519 = vmatpush.msra.mxu0 0.0
      %520 = vmatpush.msra.mxu0 0.0
      %521 = vmatpush.msra.mxu0 0.0
      %522 = vmatpush.msra.mxu0 0.0
      %523 = vmatpush.msra.mxu0 0.0
      %524 = vmatpush.msra.mxu0 0.0
      %525 = vmatpush.msra.mxu0 0.0
      %526 = vmatpush.msra.mxu0 0.0
      %527 = vmatpush.msra.mxu0 0.0
      %528 = vmatpush.msra.mxu0 0.0
      %529 = vmatpush.msra.mxu0 0.0
      %530 = vmatpush.msra.mxu0 0.0
      %531 = vmatpush.msra.mxu0 %v511
      %532 = vmatmul.f32.gmra.mxu0 %v508
      %v533 = vpop.f32.mrf.mxu0
      %v534 = vadd.f32 0.0, %v533
      %535 = vdwg.mxu0
      %536 = vmatpush.msra.mxu0 0.0
      %537 = vmatpush.msra.mxu0 0.0
      %538 = vmatpush.msra.mxu0 0.0
      %539 = vmatpush.msra.mxu0 0.0
      %540 = vmatpush.msra.mxu0 0.0
      %541 = vmatpush.msra.mxu0 0.0
      %542 = vmatpush.msra.mxu0 0.0
      %543 = vmatpush.msra.mxu0 0.0
      %544 = vmatpush.msra.mxu0 0.0
      %545 = vmatpush.msra.mxu0 0.0
      %546 = vmatpush.msra.mxu0 0.0
      %547 = vmatpush.msra.mxu0 0.0
      %548 = vmatpush.msra.mxu0 0.0
      %549 = vmatpush.msra.mxu0 0.0
      %550 = vmatpush.msra.mxu0 0.0
      %551 = vmatpush.msra.mxu0 %v514
      %552 = vmatmul.f32.gmra.mxu0 %v508
      %v553 = vpop.f32.mrf.mxu0
      %v554 = vadd.f32 0.0, %v553
      %555 = vdwg.mxu0
      %v556 = vadd.f32 %v485, %v534
      %v557 = vadd.f32 %v486, %v554
      %s558 = scalar_lea.vmem %s3, 32
      %v559 = vld [vmem:[%s558] sm:$0xff]
      %560 = vst [vmem:[#allocation1] ss:$2 sm:$0xff] %v248
      %v561 = vld.sshfl [vmem:[#allocation1] sm:$0xff pattern:$0x75316420]
      %v562 = vld.sshfl [vmem:[#allocation1 + $0x8] sm:$0xff pattern:$0x75316420]
      %v564 = vsel %vm312, %v559, 0
      %v566 = vsel %vm316, %v561, 0
      %v568 = vsel %vm316, %v562, 0
      %570 = vmatpush.msra.mxu0 0.0
      %571 = vmatpush.msra.mxu0 0.0
      %572 = vmatpush.msra.mxu0 0.0
      %573 = vmatpush.msra.mxu0 0.0
      %574 = vmatpush.msra.mxu0 0.0
      %575 = vmatpush.msra.mxu0 0.0
      %576 = vmatpush.msra.mxu0 0.0
      %577 = vmatpush.msra.mxu0 0.0
      %578 = vmatpush.msra.mxu0 0.0
      %579 = vmatpush.msra.mxu0 0.0
      %580 = vmatpush.msra.mxu0 0.0
      %581 = vmatpush.msra.mxu0 0.0
      %582 = vmatpush.msra.mxu0 0.0
      %583 = vmatpush.msra.mxu0 0.0
      %584 = vmatpush.msra.mxu0 0.0
      %585 = vmatpush.msra.mxu0 %v566
      %586 = vmatmul.f32.gmra.mxu0 %v564
      %v587 = vpop.f32.mrf.mxu0
      %v588 = vadd.f32 0.0, %v587
      %589 = vdwg.mxu0
      %590 = vmatpush.msra.mxu0 0.0
      %591 = vmatpush.msra.mxu0 0.0
      %592 = vmatpush.msra.mxu0 0.0
      %593 = vmatpush.msra.mxu0 0.0
      %594 = vmatpush.msra.mxu0 0.0
      %595 = vmatpush.msra.mxu0 0.0
      %596 = vmatpush.msra.mxu0 0.0
      %597 = vmatpush.msra.mxu0 0.0
      %598 = vmatpush.msra.mxu0 0.0
      %599 = vmatpush.msra.mxu0 0.0
      %600 = vmatpush.msra.mxu0 0.0
      %601 = vmatpush.msra.mxu0 0.0
      %602 = vmatpush.msra.mxu0 0.0
      %603 = vmatpush.msra.mxu0 0.0
      %604 = vmatpush.msra.mxu0 0.0
      %605 = vmatpush.msra.mxu0 %v568
      %606 = vmatmul.f32.gmra.mxu0 %v564
      %v607 = vpop.f32.mrf.mxu0
      %v608 = vadd.f32 0.0, %v607
      %609 = vdwg.mxu0
      %v610 = vadd.f32 %v556, %v588
      %v611 = vadd.f32 %v557, %v608
      %612 = vst [vmem:[#allocation1] ss:$2 sm:$0xff] %v248
      %v613 = vld.sshfl [vmem:[#allocation1] sm:$0xff pattern:$0x75316420]
      %v614 = vld.sshfl [vmem:[#allocation1 + $0x8] sm:$0xff pattern:$0x75316420]
      %617 = vrot.lane.b32.xlu0 %v613, 127
      %v618 = vpop.permute.xlu0 %617
      %619 = vrot.lane.b32.xlu0 %v614, 127
      %v620 = vpop.permute.xlu0 %619
      %vm621 = vcmp.lt.s32.totalorder %v250, 127
      %v622 = vsel %vm621, %v618, %v620
      %v623 = vsel %vm621, %v620, %v618
      %v624 = vsel %vm424, 1, 0
      %v625 = vsel %vm425, 1, 0
      %vm626 = vcmp.eq.s32.totalorder %v624, 1
      %vm627 = vcmp.eq.s32.totalorder %v625, 1
      %v628 = vsel %vm626, %v622, 0.0
      %v629 = vsel %vm627, %v623, 0.0
      %s630 = scalar_lea.vmem %s3, 40
      %v631 = vld [vmem:[%s630] sm:$0xff]
      %v633 = vsel %vm312, %v631, 0
      %v636 = vsel %vm316, %v628, 0
      %v639 = vsel %vm316, %v629, 0
      %641 = vmatpush.msra.mxu0 0.0
      %642 = vmatpush.msra.mxu0 0.0
      %643 = vmatpush.msra.mxu0 0.0
      %644 = vmatpush.msra.mxu0 0.0
      %645 = vmatpush.msra.mxu0 0.0
      %646 = vmatpush.msra.mxu0 0.0
      %647 = vmatpush.msra.mxu0 0.0
      %648 = vmatpush.msra.mxu0 0.0
      %649 = vmatpush.msra.mxu0 0.0
      %650 = vmatpush.msra.mxu0 0.0
      %651 = vmatpush.msra.mxu0 0.0
      %652 = vmatpush.msra.mxu0 0.0
      %653 = vmatpush.msra.mxu0 0.0
      %654 = vmatpush.msra.mxu0 0.0
      %655 = vmatpush.msra.mxu0 0.0
      %656 = vmatpush.msra.mxu0 %v636
      %657 = vmatmul.f32.gmra.mxu0 %v633
      %v658 = vpop.f32.mrf.mxu0
      %v659 = vadd.f32 0.0, %v658
      %660 = vdwg.mxu0
      %661 = vmatpush.msra.mxu0 0.0
      %662 = vmatpush.msra.mxu0 0.0
      %663 = vmatpush.msra.mxu0 0.0
      %664 = vmatpush.msra.mxu0 0.0
      %665 = vmatpush.msra.mxu0 0.0
      %666 = vmatpush.msra.mxu0 0.0
      %667 = vmatpush.msra.mxu0 0.0
      %668 = vmatpush.msra.mxu0 0.0
      %669 = vmatpush.msra.mxu0 0.0
      %670 = vmatpush.msra.mxu0 0.0
      %671 = vmatpush.msra.mxu0 0.0
      %672 = vmatpush.msra.mxu0 0.0
      %673 = vmatpush.msra.mxu0 0.0
      %674 = vmatpush.msra.mxu0 0.0
      %675 = vmatpush.msra.mxu0 0.0
      %676 = vmatpush.msra.mxu0 %v639
      %677 = vmatmul.f32.gmra.mxu0 %v633
      %v678 = vpop.f32.mrf.mxu0
      %v679 = vadd.f32 0.0, %v678
      %680 = vdwg.mxu0
      %v681 = vadd.f32 %v610, %v659
      %v682 = vadd.f32 %v611, %v679
      %683 = vst [vmem:[#allocation1] ss:$2 sm:$0xff] %v248
      %v684 = vld.sshfl [vmem:[#allocation1] sm:$0xff pattern:$0x75316420]
      %v685 = vld.sshfl [vmem:[#allocation1 + $0x8] sm:$0xff pattern:$0x75316420]
      %688 = vrot.lane.b32.xlu0 %v684, 113
      %v689 = vpop.permute.xlu0 %688
      %690 = vrot.lane.b32.xlu0 %v685, 113
      %v691 = vpop.permute.xlu0 %690
      %vm692 = vcmp.lt.s32.totalorder %v250, 113
      %v693 = vsel %vm692, %v689, %v691
      %v694 = vsel %vm692, %v691, %v689
      %vm695 = vcmp.lt.s32.totalorder %v250, 240
      %vm696 = vcmp.lt.s32.totalorder %v251, 240
      %vm697 = vmand %vm695, %vm281
      %vm698 = vmand %vm696, %vm282
      %v699 = vsel %vm697, 1, 0
      %v700 = vsel %vm698, 1, 0
      %vm701 = vcmp.eq.s32.totalorder %v699, 1
      %vm702 = vcmp.eq.s32.totalorder %v700, 1
      %v703 = vsel %vm701, %v693, 0.0
      %v704 = vsel %vm702, %v694, 0.0
      %s705 = scalar_lea.vmem %s3, 48
      %v706 = vld [vmem:[%s705] sm:$0xff]
      %v708 = vsel %vm312, %v706, 0
      %v711 = vsel %vm316, %v703, 0
      %v714 = vsel %vm316, %v704, 0
      %716 = vmatpush.msra.mxu0 0.0
      %717 = vmatpush.msra.mxu0 0.0
      %718 = vmatpush.msra.mxu0 0.0
      %719 = vmatpush.msra.mxu0 0.0
      %720 = vmatpush.msra.mxu0 0.0
      %721 = vmatpush.msra.mxu0 0.0
      %722 = vmatpush.msra.mxu0 0.0
      %723 = vmatpush.msra.mxu0 0.0
      %724 = vmatpush.msra.mxu0 0.0
      %725 = vmatpush.msra.mxu0 0.0
      %726 = vmatpush.msra.mxu0 0.0
      %727 = vmatpush.msra.mxu0 0.0
      %728 = vmatpush.msra.mxu0 0.0
      %729 = vmatpush.msra.mxu0 0.0
      %730 = vmatpush.msra.mxu0 0.0
      %731 = vmatpush.msra.mxu0 %v711
      %732 = vmatmul.f32.gmra.mxu0 %v708
      %v733 = vpop.f32.mrf.mxu0
      %v734 = vadd.f32 0.0, %v733
      %735 = vdwg.mxu0
      %736 = vmatpush.msra.mxu0 0.0
      %737 = vmatpush.msra.mxu0 0.0
      %738 = vmatpush.msra.mxu0 0.0
      %739 = vmatpush.msra.mxu0 0.0
      %740 = vmatpush.msra.mxu0 0.0
      %741 = vmatpush.msra.mxu0 0.0
      %742 = vmatpush.msra.mxu0 0.0
      %743 = vmatpush.msra.mxu0 0.0
      %744 = vmatpush.msra.mxu0 0.0
      %745 = vmatpush.msra.mxu0 0.0
      %746 = vmatpush.msra.mxu0 0.0
      %747 = vmatpush.msra.mxu0 0.0
      %748 = vmatpush.msra.mxu0 0.0
      %749 = vmatpush.msra.mxu0 0.0
      %750 = vmatpush.msra.mxu0 0.0
      %751 = vmatpush.msra.mxu0 %v714
      %752 = vmatmul.f32.gmra.mxu0 %v708
      %v753 = vpop.f32.mrf.mxu0
      %v754 = vadd.f32 0.0, %v753
      %755 = vdwg.mxu0
      %v756 = vadd.f32 %v681, %v734
      %v757 = vadd.f32 %v682, %v754
      %758 = vst [vmem:[#allocation1] ss:$2 sm:$0xff] %v248
      %v759 = vld.sshfl [vmem:[#allocation1] sm:$0xff pattern:$0x75316420]
      %v760 = vld.sshfl [vmem:[#allocation1 + $0x8] sm:$0xff pattern:$0x75316420]
      %763 = vrot.lane.b32.xlu0 %v759, 112
      %v764 = vpop.permute.xlu0 %763
      %765 = vrot.lane.b32.xlu0 %v760, 112
      %v766 = vpop.permute.xlu0 %765
      %vm767 = vcmp.lt.s32.totalorder %v250, 112
      %v768 = vsel %vm767, %v764, %v766
      %v769 = vsel %vm767, %v766, %v764
      %v770 = vsel %vm695, 1, 0
      %v771 = vsel %vm696, 1, 0
      %vm772 = vcmp.eq.s32.totalorder %v770, 1
      %vm773 = vcmp.eq.s32.totalorder %v771, 1
      %v774 = vsel %vm772, %v768, 0.0
      %v775 = vsel %vm773, %v769, 0.0
      %s776 = scalar_lea.vmem %s3, 56
      %v777 = vld [vmem:[%s776] sm:$0xff]
      %v779 = vsel %vm312, %v777, 0
      %v782 = vsel %vm316, %v774, 0
      %v785 = vsel %vm316, %v775, 0
      %787 = vmatpush.msra.mxu0 0.0
      %788 = vmatpush.msra.mxu0 0.0
      %789 = vmatpush.msra.mxu0 0.0
      %790 = vmatpush.msra.mxu0 0.0
      %791 = vmatpush.msra.mxu0 0.0
      %792 = vmatpush.msra.mxu0 0.0
      %793 = vmatpush.msra.mxu0 0.0
      %794 = vmatpush.msra.mxu0 0.0
      %795 = vmatpush.msra.mxu0 0.0
      %796 = vmatpush.msra.mxu0 0.0
      %797 = vmatpush.msra.mxu0 0.0
      %798 = vmatpush.msra.mxu0 0.0
      %799 = vmatpush.msra.mxu0 0.0
      %800 = vmatpush.msra.mxu0 0.0
      %801 = vmatpush.msra.mxu0 0.0
      %802 = vmatpush.msra.mxu0 %v782
      %803 = vmatmul.f32.gmra.mxu0 %v779
      %v804 = vpop.f32.mrf.mxu0
      %v805 = vadd.f32 0.0, %v804
      %806 = vdwg.mxu0
      %807 = vmatpush.msra.mxu0 0.0
      %808 = vmatpush.msra.mxu0 0.0
      %809 = vmatpush.msra.mxu0 0.0
      %810 = vmatpush.msra.mxu0 0.0
      %811 = vmatpush.msra.mxu0 0.0
      %812 = vmatpush.msra.mxu0 0.0
      %813 = vmatpush.msra.mxu0 0.0
      %814 = vmatpush.msra.mxu0 0.0
      %815 = vmatpush.msra.mxu0 0.0
      %816 = vmatpush.msra.mxu0 0.0
      %817 = vmatpush.msra.mxu0 0.0
      %818 = vmatpush.msra.mxu0 0.0
      %819 = vmatpush.msra.mxu0 0.0
      %820 = vmatpush.msra.mxu0 0.0
      %821 = vmatpush.msra.mxu0 0.0
      %822 = vmatpush.msra.mxu0 %v785
      %823 = vmatmul.f32.gmra.mxu0 %v779
      %v824 = vpop.f32.mrf.mxu0
      %v825 = vadd.f32 0.0, %v824
      %826 = vdwg.mxu0
      %v827 = vadd.f32 %v756, %v805
      %v828 = vadd.f32 %v757, %v825
      %829 = vst [vmem:[#allocation1] ss:$2 sm:$0xff] %v248
      %v830 = vld.sshfl [vmem:[#allocation1] sm:$0xff pattern:$0x75316420]
      %v831 = vld.sshfl [vmem:[#allocation1 + $0x8] sm:$0xff pattern:$0x75316420]
      %834 = vrot.lane.b32.xlu0 %v830, 111
      %v835 = vpop.permute.xlu0 %834
      %836 = vrot.lane.b32.xlu0 %v831, 111
      %v837 = vpop.permute.xlu0 %836
      %vm838 = vcmp.lt.s32.totalorder %v250, 111
      %v839 = vsel %vm838, %v835, %v837
      %v840 = vsel %vm838, %v837, %v835
      %vm841 = vmand %vm695, %vm424
      %vm842 = vmand %vm696, %vm425
      %v843 = vsel %vm841, 1, 0
      %v844 = vsel %vm842, 1, 0
      %vm845 = vcmp.eq.s32.totalorder %v843, 1
      %vm846 = vcmp.eq.s32.totalorder %v844, 1
      %v847 = vsel %vm845, %v839, 0.0
      %v848 = vsel %vm846, %v840, 0.0
      %s849 = scalar_lea.vmem %s3, 64
      %v850 = vld [vmem:[%s849] sm:$0xff]
      %v852 = vsel %vm312, %v850, 0
      %v855 = vsel %vm316, %v847, 0
      %v858 = vsel %vm316, %v848, 0
      %860 = vmatpush.msra.mxu0 0.0
      %861 = vmatpush.msra.mxu0 0.0
      %862 = vmatpush.msra.mxu0 0.0
      %863 = vmatpush.msra.mxu0 0.0
      %864 = vmatpush.msra.mxu0 0.0
      %865 = vmatpush.msra.mxu0 0.0
      %866 = vmatpush.msra.mxu0 0.0
      %867 = vmatpush.msra.mxu0 0.0
      %868 = vmatpush.msra.mxu0 0.0
      %869 = vmatpush.msra.mxu0 0.0
      %870 = vmatpush.msra.mxu0 0.0
      %871 = vmatpush.msra.mxu0 0.0
      %872 = vmatpush.msra.mxu0 0.0
      %873 = vmatpush.msra.mxu0 0.0
      %874 = vmatpush.msra.mxu0 0.0
      %875 = vmatpush.msra.mxu0 %v855
      %876 = vmatmul.f32.gmra.mxu0 %v852
      %v877 = vpop.f32.mrf.mxu0
      %v878 = vadd.f32 0.0, %v877
      %879 = vdwg.mxu0
      %880 = vmatpush.msra.mxu0 0.0
      %881 = vmatpush.msra.mxu0 0.0
      %882 = vmatpush.msra.mxu0 0.0
      %883 = vmatpush.msra.mxu0 0.0
      %884 = vmatpush.msra.mxu0 0.0
      %885 = vmatpush.msra.mxu0 0.0
      %886 = vmatpush.msra.mxu0 0.0
      %887 = vmatpush.msra.mxu0 0.0
      %888 = vmatpush.msra.mxu0 0.0
      %889 = vmatpush.msra.mxu0 0.0
      %890 = vmatpush.msra.mxu0 0.0
      %891 = vmatpush.msra.mxu0 0.0
      %892 = vmatpush.msra.mxu0 0.0
      %893 = vmatpush.msra.mxu0 0.0
      %894 = vmatpush.msra.mxu0 0.0
      %895 = vmatpush.msra.mxu0 %v858
      %896 = vmatmul.f32.gmra.mxu0 %v852
      %v897 = vpop.f32.mrf.mxu0
      %v898 = vadd.f32 0.0, %v897
      %899 = vdwg.mxu0
      %v900 = vadd.f32 %v827, %v878
      %v901 = vadd.f32 %v828, %v898
      %v902 = vld [vmem:[%s4] sm:$0x7]
      %904 = vset.pattern.permute.xlu0 0
      %905 = vperm.xlu0 %904, %v902
      %v906 = vpop.permute.xlu0 %905
      %v908 = vadd.f32 %v900, %v906
      %v909 = vadd.f32 %v901, %v906
      %v910 = vtanh.pop %v908
      %v911 = vtanh.pop %v909
      %v912 = vmul.f32 %v910, 0.5
      %v913 = vmul.f32 %v911, 0.5
      %v914 = vadd.f32 %v912, 0.5
      %v915 = vadd.f32 %v913, 0.5
      %v918 = vrot.slane %v915, 4
      %v919 = vsel %vm316, %v914, %v918
      %921 = vst [vmem:[%s224] sm:$0x77] %v919
      %p922 = scmp.lt.s32.totalorder %s16, 1
      %s923 = scalar_select %p922, %s16, 1
      %s924 = smul.addr %s923, 2
      %s925 = smul.addr %s924, 4
      %s926 = scalar_lea.vmem %s5, %s925
      // Predicated region
      $region41: #{output_conv_forward.1} parent=39 // pred_check
        %p927 = pneg %p144
      $region42: #{output_conv_forward.1} parent=39 // pred_check_branch
        %929 = sbr.rel (%p927) target = $region44
      $region43: #{output_conv_forward.1} parent=39 // pred_region
        _
      $region44: #{output_conv_forward.1} parent=39 // pred_fallthru
        _
    $region40: #{output_conv_forward.1} parent=5 // pred_fallthru
      _
    %p930 = scmp.le.s32.totalorder 2, %s11
    // Predicated region
    $region45: #{output_conv_forward.1} parent=5 // pred_check
      %p931 = pneg %p930
    $region46: #{output_conv_forward.1} parent=5 // pred_check_branch
      %933 = sbr.rel (%p931) target = $region48
    $region47: #{output_conv_forward.1} parent=5 // pred_region
      %s934 = ssub.s32 %s11, 2
      // Predicated region
      $region49: #{output_conv_forward.1} parent=47 // pred_check
        %p935 = pneg %p150
      $region50: #{output_conv_forward.1} parent=47 // pred_check_branch
        %937 = sbr.rel (%p935) target = $region52
      $region51: #{output_conv_forward.1} parent=47 // pred_region
        %p938 = scmp.lt.s32.totalorder %s17, 1
        %s939 = scalar_select %p938, %s17, 1
        %s940 = smul.addr %s939, 2
        %s941 = smul.addr %s940, 4
        %s942 = scalar_lea.vmem %s5, %s941
      $region52: #{output_conv_forward.1} parent=47 // pred_fallthru
        _
    $region48: #{output_conv_forward.1} parent=5 // pred_fallthru
      _
  $region6: #{output_conv_forward.1} parent=0 // loop_footer
    %s15 = sadd.s32 1, %s11
  $region7: #{output_conv_forward.1} parent=0 // loop_footer_branch
    %10 = sbr.rel target = $region3
  $region8: #{output_conv_forward.1} parent=0 // loop_exit
    _

</llo_original>
